<compile_context>
chip_gen: v7x
topology: tpu7x:2x2x1
jax: 0.10.0
libtpu: 0.0.40
codegen_flags: <defaults>
</compile_context>

<pallas_src>
import jax
import jax.numpy as jnp
from jax.experimental import pallas as pl
from jax.experimental.pallas import tpu as pltpu


def _round_up(x, m):
    return ((x + m - 1) // m) * m


# ----------------------------------------------------------------------------- kernel
def reward_decoder_kernel(x_ref, wenc_ref, benc_ref, w1_ref, b1_ref,
                          w2_ref, b2_ref, wo_ref, bo_ref, out_ref):
    f32 = jnp.float32

    # Fused feature extractors: x = concat([state, action]), wenc = blockdiag(Ws, Wa)
    # so relu(x @ wenc + benc) == concat([relu(state@Ws+bs), relu(action@Wa+ba)]).
    h = jnp.maximum(
        jnp.dot(x_ref[...], wenc_ref[...], preferred_element_type=f32) + benc_ref[...],
        0.0)

    # fc layer 1 (+ relu) on the concatenated embedding, single wide matmul.
    h = jnp.maximum(
        jnp.dot(h, w1_ref[...], preferred_element_type=f32) + b1_ref[...],
        0.0)

    # fc layer 2 (+ relu)
    h = jnp.maximum(
        jnp.dot(h, w2_ref[...], preferred_element_type=f32) + b2_ref[...],
        0.0)

    # fc_out (out_features == 1, deterministic -> no activation).
    # N=1 matmul would waste a full MXU pass; do it as a VPU multiply + lane
    # reduce (XLU slot, effectively free filler here).
    out_ref[...] = (
        jnp.sum(h * wo_ref[...], axis=-1, keepdims=True) + bo_ref[...]
    ).astype(out_ref.dtype)


# ----------------------------------------------------------------------------- wrapper
def reward_decoder_bisim(state, action, packed, *, block_rows=1024):
    """state: (B, aug_state_size), action: (B, action_size) -> (B, 1) reward pred."""
    B = state.shape[0]
    x = jnp.concatenate([state, action], axis=-1).astype(jnp.float32)
    in_feat = x.shape[1]

    # Batch tile: large to amortize per-step pipeline overhead (~0.35 us), but
    # small enough that 2 double-buffered (TB, in_feat) f32 tiles stay well under
    # even v7x's 32 MiB scoped-VMEM default (TB=1024, in_feat~40 -> ~330 KiB/buf).
    tb = min(block_rows, _round_up(B, 8))
    b_pad = _round_up(B, tb)
    if b_pad != B:
        x = jnp.pad(x, ((0, b_pad - B), (0, 0)))

    batch_map = lambda i: (i, 0)   # tiled over batch
    const_map = lambda i: (0, 0)   # weights: same block every step -> stay VMEM-resident

    weights = (packed["w_enc"], packed["b_enc"],
               packed["w1"], packed["b1"],
               packed["w2"], packed["b2"],
               packed["wo_row"], packed["bo"])

    out = pl.pallas_call(
        reward_decoder_kernel,
        out_shape=jax.ShapeDtypeStruct((b_pad, 1), jnp.float32),
        grid_spec=pltpu.PrefetchScalarGridSpec(
            num_scalar_prefetch=0,
            grid=(b_pad // tb,),
            in_specs=[pl.BlockSpec((tb, in_feat), batch_map)]
                     + [pl.BlockSpec(w.shape, const_map) for w in weights],
            out_specs=pl.BlockSpec((tb, 1), batch_map),
        ),
        compiler_params=pltpu.CompilerParams(
            dimension_semantics=("parallel",)),   # shard batch tiles across TCs (v7x)
    )(x, *weights)

    return out[:B]


# ----------------------------------------------------------------------------- params
def init_params(key, aug_state_size, action_size, state_embed, action_embed, layers):
    """Deterministic synthetic init (uniform, a la PyTorch Linear). Raw module params."""
    def linear(k, fan_in, fan_out):
        k1, k2 = jax.random.split(k)
        bound = 1.0 / jnp.sqrt(fan_in)
        w = jax.random.uniform(k1, (fan_in, fan_out), jnp.float32, -bound, bound)
        b = jax.random.uniform(k2, (1, fan_out), jnp.float32, -bound, bound)
        return w, b

    keys = jax.random.split(key, 5)
    ws, bs = linear(keys[0], aug_state_size, state_embed)
    wa, ba = linear(keys[1], action_size, action_embed)
    w1, b1 = linear(keys[2], state_embed + action_embed, layers[0])
    w2, b2 = linear(keys[3], layers[0], layers[1])
    wo, bo = linear(keys[4], layers[1], 1)
    return {"ws": ws, "bs": bs, "wa": wa, "ba": ba,
            "w1": w1, "b1": b1, "w2": w2, "b2": b2, "wo": wo, "bo": bo}


def pack_params(p):
    """One-time host-side repack: block-diagonal encoder weight + row-vector fc_out."""
    aug, se = p["ws"].shape
    act, ae = p["wa"].shape
    w_enc = jnp.zeros((aug + act, se + ae), jnp.float32)
    w_enc = w_enc.at[:aug, :se].set(p["ws"])
    w_enc = w_enc.at[aug:, se:].set(p["wa"])
    b_enc = jnp.concatenate([p["bs"], p["ba"]], axis=-1)
    return {"w_enc": w_enc, "b_enc": b_enc,
            "w1": p["w1"], "b1": p["b1"],
            "w2": p["w2"], "b2": p["b2"],
            "wo_row": p["wo"].T,     # (1, layers[-1]) for the lane reduce
            "bo": p["bo"]}           # (1, 1)


def reference_forward(state, action, p):
    """Pure-JAX reference mirroring the PyTorch module."""
    hs = jax.nn.relu(state @ p["ws"] + p["bs"])
    ha = jax.nn.relu(action @ p["wa"] + p["ba"])
    h = jnp.concatenate([hs, ha], axis=-1)
    h = jax.nn.relu(h @ p["w1"] + p["b1"])
    h = jax.nn.relu(h @ p["w2"] + p["b2"])
    return h @ p["wo"] + p["bo"]


# TODO(synk): multi_head / gaussian / bernoulli / categorical heads and
# input_prev_state are not exercised here (module defaults are deterministic,
# input_action=True, input_prev_state=False).

if __name__ == "__main__":
    # Small config consistent with the module's __init__ signature.
    aug_state_size = 32   # augmented_encode_state_size
    action_size = 8
    state_embed = 32      # state_embed_size
    action_embed = 16     # action_embed_size
    layers = (64, 64)

    key = jax.random.PRNGKey(0)
    k_state, k_action, k_params = jax.random.split(key, 3)
    params = init_params(k_params, aug_state_size, action_size,
                         state_embed, action_embed, layers)
    packed = pack_params(params)

    # 1) Small batch (single tile).
    B = 8
    state = jax.random.normal(k_state, (B, aug_state_size), jnp.float32)
    action = jax.random.normal(k_action, (B, action_size), jnp.float32)
    out = jax.block_until_ready(reward_decoder_bisim(state, action, packed))
    ref = reference_forward(state, action, params)
    assert out.shape == (B, 1)
    assert jnp.allclose(out, ref, atol=1e-5, rtol=1e-5)

    # 2) Ragged batch (exercises padding + multi-step grid with a small tile).
    B2 = 37
    state2 = jax.random.normal(jax.random.PRNGKey(1), (B2, aug_state_size), jnp.float32)
    action2 = jax.random.normal(jax.random.PRNGKey(2), (B2, action_size), jnp.float32)
    out2 = jax.block_until_ready(
        reward_decoder_bisim(state2, action2, packed, block_rows=16))
    ref2 = reference_forward(state2, action2, params)
    assert out2.shape == (B2, 1)
    assert jnp.allclose(out2, ref2, atol=1e-5, rtol=1e-5)

    print("KERNEL_OK")
</pallas_src>

<mosaic_0001>
module attributes {stable_mosaic.version = 11 : i64} {
  func.func @reward_decoder_kernel(%arg0: i32, %arg1: memref<8x40xf32, #tpu.memory_space<vmem>>, %arg2: memref<40x48xf32, #tpu.memory_space<vmem>>, %arg3: memref<1x48xf32, #tpu.memory_space<vmem>>, %arg4: memref<48x64xf32, #tpu.memory_space<vmem>>, %arg5: memref<1x64xf32, #tpu.memory_space<vmem>>, %arg6: memref<64x64xf32, #tpu.memory_space<vmem>>, %arg7: memref<1x64xf32, #tpu.memory_space<vmem>>, %arg8: memref<1x64xf32, #tpu.memory_space<vmem>>, %arg9: memref<1x1xf32, #tpu.memory_space<vmem>>, %arg10: memref<8x1xf32, #tpu.memory_space<vmem>>) attributes {dimension_semantics = [#tpu.dimension_semantics<parallel>], iteration_bounds = array<i64: 1>, scalar_prefetch = 0 : i64, scratch_operands = 0 : i64, tpu.core_type = #tpu.core_type<tc>, window_params = [{transform_indices = @transform_0, window_bounds = array<i64: 8, 40>}, {pipeline_mode = #tpu.pipeline_mode<synchronous>, transform_indices = @transform_1, window_bounds = array<i64: 40, 48>}, {pipeline_mode = #tpu.pipeline_mode<synchronous>, transform_indices = @transform_2, window_bounds = array<i64: 1, 48>}, {pipeline_mode = #tpu.pipeline_mode<synchronous>, transform_indices = @transform_3, window_bounds = array<i64: 48, 64>}, {pipeline_mode = #tpu.pipeline_mode<synchronous>, transform_indices = @transform_4, window_bounds = array<i64: 1, 64>}, {pipeline_mode = #tpu.pipeline_mode<synchronous>, transform_indices = @transform_5, window_bounds = array<i64: 64, 64>}, {pipeline_mode = #tpu.pipeline_mode<synchronous>, transform_indices = @transform_6, window_bounds = array<i64: 1, 64>}, {pipeline_mode = #tpu.pipeline_mode<synchronous>, transform_indices = @transform_7, window_bounds = array<i64: 1, 64>}, {pipeline_mode = #tpu.pipeline_mode<synchronous>, transform_indices = @transform_8, window_bounds = array<i64: 1, 1>}, {transform_indices = @transform_9, window_bounds = array<i64: 8, 1>}]} {
    %c0 = arith.constant 0 : index
    %c0_0 = arith.constant 0 : index
    %0 = vector.load %arg1[%c0, %c0_0] : memref<8x40xf32, #tpu.memory_space<vmem>>, vector<8x40xf32>
    %c0_1 = arith.constant 0 : index
    %c0_2 = arith.constant 0 : index
    %1 = vector.load %arg2[%c0_1, %c0_2] : memref<40x48xf32, #tpu.memory_space<vmem>>, vector<40x48xf32>
    %cst = arith.constant dense<0.000000e+00> : vector<8x48xf32>
    %2 = tpu.matmul %0, %1, %cst {dimension_numbers = #tpu.dot_dimension_numbers<[1], [0], [0], [1], [0, 0, 1, 1], [], []>} : vector<8x40xf32>, vector<40x48xf32>, vector<8x48xf32> -> vector<8x48xf32>
    %c0_3 = arith.constant 0 : index
    %c0_4 = arith.constant 0 : index
    %3 = vector.load %arg3[%c0_3, %c0_4] : memref<1x48xf32, #tpu.memory_space<vmem>>, vector<1x48xf32>
    %4 = vector.broadcast %3 : vector<1x48xf32> to vector<8x48xf32>
    %5 = arith.addf %2, %4 : vector<8x48xf32>
    %cst_5 = arith.constant 0.000000e+00 : f32
    %6 = vector.broadcast %cst_5 : f32 to vector<8x48xf32>
    %7 = arith.maximumf %5, %6 : vector<8x48xf32>
    %c0_6 = arith.constant 0 : index
    %c0_7 = arith.constant 0 : index
    %8 = vector.load %arg4[%c0_6, %c0_7] : memref<48x64xf32, #tpu.memory_space<vmem>>, vector<48x64xf32>
    %cst_8 = arith.constant dense<0.000000e+00> : vector<8x64xf32>
    %9 = tpu.matmul %7, %8, %cst_8 {dimension_numbers = #tpu.dot_dimension_numbers<[1], [0], [0], [1], [0, 0, 1, 1], [], []>} : vector<8x48xf32>, vector<48x64xf32>, vector<8x64xf32> -> vector<8x64xf32>
    %c0_9 = arith.constant 0 : index
    %c0_10 = arith.constant 0 : index
    %10 = vector.load %arg5[%c0_9, %c0_10] : memref<1x64xf32, #tpu.memory_space<vmem>>, vector<1x64xf32>
    %11 = vector.broadcast %10 : vector<1x64xf32> to vector<8x64xf32>
    %12 = arith.addf %9, %11 : vector<8x64xf32>
    %cst_11 = arith.constant 0.000000e+00 : f32
    %13 = vector.broadcast %cst_11 : f32 to vector<8x64xf32>
    %14 = arith.maximumf %12, %13 : vector<8x64xf32>
    %c0_12 = arith.constant 0 : index
    %c0_13 = arith.constant 0 : index
    %15 = vector.load %arg6[%c0_12, %c0_13] : memref<64x64xf32, #tpu.memory_space<vmem>>, vector<64x64xf32>
    %cst_14 = arith.constant dense<0.000000e+00> : vector<8x64xf32>
    %16 = tpu.matmul %14, %15, %cst_14 {dimension_numbers = #tpu.dot_dimension_numbers<[1], [0], [0], [1], [0, 0, 1, 1], [], []>} : vector<8x64xf32>, vector<64x64xf32>, vector<8x64xf32> -> vector<8x64xf32>
    %c0_15 = arith.constant 0 : index
    %c0_16 = arith.constant 0 : index
    %17 = vector.load %arg7[%c0_15, %c0_16] : memref<1x64xf32, #tpu.memory_space<vmem>>, vector<1x64xf32>
    %18 = vector.broadcast %17 : vector<1x64xf32> to vector<8x64xf32>
    %19 = arith.addf %16, %18 : vector<8x64xf32>
    %cst_17 = arith.constant 0.000000e+00 : f32
    %20 = vector.broadcast %cst_17 : f32 to vector<8x64xf32>
    %21 = arith.maximumf %19, %20 : vector<8x64xf32>
    %c0_18 = arith.constant 0 : index
    %c0_19 = arith.constant 0 : index
    %22 = vector.load %arg8[%c0_18, %c0_19] : memref<1x64xf32, #tpu.memory_space<vmem>>, vector<1x64xf32>
    %23 = vector.broadcast %22 : vector<1x64xf32> to vector<8x64xf32>
    %24 = arith.mulf %21, %23 : vector<8x64xf32>
    %cst_20 = arith.constant dense<0.000000e+00> : vector<8xf32>
    %25 = vector.multi_reduction <add>, %24, %cst_20 [1] : vector<8x64xf32> to vector<8xf32>
    %26 = vector.shape_cast %25 : vector<8xf32> to vector<8x1xf32>
    %c0_21 = arith.constant 0 : index
    %c0_22 = arith.constant 0 : index
    %27 = vector.load %arg9[%c0_21, %c0_22] : memref<1x1xf32, #tpu.memory_space<vmem>>, vector<1x1xf32>
    %28 = vector.broadcast %27 : vector<1x1xf32> to vector<8x1xf32>
    %29 = arith.addf %26, %28 : vector<8x1xf32>
    %c0_23 = arith.constant 0 : index
    %c0_24 = arith.constant 0 : index
    %30 = vector.load %arg10[%c0_23, %c0_24] : memref<8x1xf32, #tpu.memory_space<vmem>>, vector<8x1xf32>
    tpu.vector_store %arg10[%c0_23, %c0_24], %29 {strides = array<i32>} : memref<8x1xf32, #tpu.memory_space<vmem>>, vector<8x1xf32>,
    return
  }
  func.func @transform_0(%arg0: i32) -> (i32, i32) {
    %c0_i32 = arith.constant 0 : i32
    %c0_i32_0 = arith.constant 0 : i32
    return %arg0, %c0_i32 : i32, i32
  }
  func.func @transform_1(%arg0: i32) -> (i32, i32) {
    %c0_i32 = arith.constant 0 : i32
    %c0_i32_0 = arith.constant 0 : i32
    %c0_i32_1 = arith.constant 0 : i32
    return %c0_i32, %c0_i32_0 : i32, i32
  }
  func.func @transform_2(%arg0: i32) -> (i32, i32) {
    %c0_i32 = arith.constant 0 : i32
    %c0_i32_0 = arith.constant 0 : i32
    %c0_i32_1 = arith.constant 0 : i32
    return %c0_i32, %c0_i32_0 : i32, i32
  }
  func.func @transform_3(%arg0: i32) -> (i32, i32) {
    %c0_i32 = arith.constant 0 : i32
    %c0_i32_0 = arith.constant 0 : i32
    %c0_i32_1 = arith.constant 0 : i32
    return %c0_i32, %c0_i32_0 : i32, i32
  }
  func.func @transform_4(%arg0: i32) -> (i32, i32) {
    %c0_i32 = arith.constant 0 : i32
    %c0_i32_0 = arith.constant 0 : i32
    %c0_i32_1 = arith.constant 0 : i32
    return %c0_i32, %c0_i32_0 : i32, i32
  }
  func.func @transform_5(%arg0: i32) -> (i32, i32) {
    %c0_i32 = arith.constant 0 : i32
    %c0_i32_0 = arith.constant 0 : i32
    %c0_i32_1 = arith.constant 0 : i32
    return %c0_i32, %c0_i32_0 : i32, i32
  }
  func.func @transform_6(%arg0: i32) -> (i32, i32) {
    %c0_i32 = arith.constant 0 : i32
    %c0_i32_0 = arith.constant 0 : i32
    %c0_i32_1 = arith.constant 0 : i32
    return %c0_i32, %c0_i32_0 : i32, i32
  }
  func.func @transform_7(%arg0: i32) -> (i32, i32) {
    %c0_i32 = arith.constant 0 : i32
    %c0_i32_0 = arith.constant 0 : i32
    %c0_i32_1 = arith.constant 0 : i32
    return %c0_i32, %c0_i32_0 : i32, i32
  }
  func.func @transform_8(%arg0: i32) -> (i32, i32) {
    %c0_i32 = arith.constant 0 : i32
    %c0_i32_0 = arith.constant 0 : i32
    %c0_i32_1 = arith.constant 0 : i32
    return %c0_i32, %c0_i32_0 : i32, i32
  }
  func.func @transform_9(%arg0: i32) -> (i32, i32) {
    %c0_i32 = arith.constant 0 : i32
    %c0_i32_0 = arith.constant 0 : i32
    return %arg0, %c0_i32 : i32, i32
  }
}

</mosaic_0001>

<llo_original>
// kernel: tpu_custom_call.1
$region0: #{tpu_custom_call.1}
  #allocation0 [shape = 'u32[]', space=smem, size = 0x4, offset = 0x4, fixed_abs, tag = 'smem constant byte address 0x4 - core index']
  #allocation1 [shape = 'u32[144,128]{1,0:T(1,128)}', space=vmem, size = 0x12000, scoped, tag = 'internal scratch']
  #allocation2 [shape = 'f32[1,1]{1,0:T(1,128)S(1)}', space=vmem, size = 0x200, scoped, tag = 'scoped memory for tpu_custom_call.1']
  %s0 = inlined_call_operand.hbm [shape: f32[8,40], index: 0, kind: input, shape index: {}]
  %s1 = inlined_call_operand.hbm [shape: f32[40,48], index: 1, kind: input, shape index: {}]
  %s2 = inlined_call_operand.vmem [shape: f32[1,48], index: 2, kind: input, shape index: {}]
  %s3 = inlined_call_operand.hbm [shape: f32[48,64], index: 3, kind: input, shape index: {}]
  %s4 = inlined_call_operand.vmem [shape: f32[1,64], index: 4, kind: input, shape index: {}]
  %s5 = inlined_call_operand.hbm [shape: f32[64,64], index: 5, kind: input, shape index: {}]
  %s6 = inlined_call_operand.vmem [shape: f32[1,64], index: 6, kind: input, shape index: {}]
  %s7 = inlined_call_operand.vmem [shape: f32[1,64], index: 7, kind: input, shape index: {}]
  %s8 = inlined_call_operand.<no memory space> [shape: f32[1,1], index: 8, kind: input, shape index: {}]
  %s9 = inlined_call_operand.vmem [shape: f32[8,1], index: 9, kind: output, shape index: {}]
  %s10 = sld [smem:[#allocation0]]
  $region62: #{tpu_custom_call.1} parent=0
    _
  %s12 = ssub.s32 1, %s10
  %s13 = scalar_select 0, %s12, %s10
  %v14 = vstv %s8
  %15 = vst [vmem:[#allocation2] sm:$0x1] %v14
  $region1: #{tpu_custom_call.1} parent=0
    #allocation3 [shape = 'u8[4096]{0}', space=vmem, size = 0x1000, scoped, tag = 'input window, operand 0, single buffered']
    #allocation4 [shape = 's32[1]{0}', space=sflag, size = 0x4, scoped, tag = 'scoped memory for tpu_custom_call.1']
    #allocation5 [shape = 'u8[20480]{0}', space=vmem, size = 0x5000, scoped, tag = 'input window, operand 1, single buffered']
    #allocation6 [shape = 's32[1]{0}', space=sflag, size = 0x4, scoped, tag = 'scoped memory for tpu_custom_call.1']
    #allocation7 [shape = 'u8[24576]{0}', space=vmem, size = 0x6000, scoped, tag = 'input window, operand 3, single buffered']
    #allocation8 [shape = 'u8[32768]{0}', space=vmem, size = 0x8000, scoped, tag = 'input window, operand 5, single buffered']
    #allocation9 [shape = 's32[1]{0}', space=sflag, size = 0x4, scoped, tag = 'scoped memory for tpu_custom_call.1']
    %16 = vsyncpa [#allocation4], 0
    %17 = vsyncpa [#allocation6], 0
    %18 = vsyncpa [#allocation9], 0
    // Predicated region
    $region2: #{tpu_custom_call.1} parent=1 // pred_check
      _
    $region3: #{tpu_custom_call.1} parent=1 // pred_check_branch
      %20 = sbr.rel (0) target = $region5
    $region4: #{tpu_custom_call.1} parent=1 // pred_region
      %s22 = ssub.s32 128, 128
      %23 = vsyncadd [#allocation4], %s22
      %s25 = sshll.u32 [#allocation3], 4
      %s26 = int_to_ptr.vmem [resolvable:$true] %s25
      %28 = dma.hbm_to_vmem [thread:$0]  %s0, 128, %s26, [#allocation4]
    $region5: #{tpu_custom_call.1} parent=1 // pred_fallthru
      _
    // Predicated region
    $region6: #{tpu_custom_call.1} parent=1 // pred_check
      _
    $region7: #{tpu_custom_call.1} parent=1 // pred_check_branch
      %30 = sbr.rel (0) target = $region9
    $region8: #{tpu_custom_call.1} parent=1 // pred_region
      %s32 = ssub.s32 640, 640
      %33 = vsyncadd [#allocation6], %s32
      %s34 = sshll.u32 [#allocation5], 4
      %s35 = int_to_ptr.vmem [resolvable:$true] %s34
      %40 = dma.hbm_to_vmem [thread:$0]  %s1, 640, %s35, [#allocation6], 128, 128, 8
    $region9: #{tpu_custom_call.1} parent=1 // pred_fallthru
      _
    // Predicated region
    $region10: #{tpu_custom_call.1} parent=1 // pred_check
      _
    $region11: #{tpu_custom_call.1} parent=1 // pred_check_branch
      %42 = sbr.rel (0) target = $region13
    $region12: #{tpu_custom_call.1} parent=1 // pred_region
      _
    $region13: #{tpu_custom_call.1} parent=1 // pred_fallthru
      _
    // Predicated region
    $region14: #{tpu_custom_call.1} parent=1 // pred_check
      _
    $region15: #{tpu_custom_call.1} parent=1 // pred_check_branch
      %44 = sbr.rel (0) target = $region17
    $region16: #{tpu_custom_call.1} parent=1 // pred_region
      %s46 = ssub.s32 768, 768
      %47 = vsyncadd [#allocation6], %s46
      %s48 = sshll.u32 [#allocation7], 4
      %s49 = int_to_ptr.vmem [resolvable:$true] %s48
      %54 = dma.hbm_to_vmem [thread:$0]  %s3, 768, %s49, [#allocation6], 128, 128, 8
    $region17: #{tpu_custom_call.1} parent=1 // pred_fallthru
      _
    // Predicated region
    $region18: #{tpu_custom_call.1} parent=1 // pred_check
      _
    $region19: #{tpu_custom_call.1} parent=1 // pred_check_branch
      %56 = sbr.rel (0) target = $region21
    $region20: #{tpu_custom_call.1} parent=1 // pred_region
      _
    $region21: #{tpu_custom_call.1} parent=1 // pred_fallthru
      _
    // Predicated region
    $region22: #{tpu_custom_call.1} parent=1 // pred_check
      _
    $region23: #{tpu_custom_call.1} parent=1 // pred_check_branch
      %58 = sbr.rel (0) target = $region25
    $region24: #{tpu_custom_call.1} parent=1 // pred_region
      %s60 = ssub.s32 1024, 1024
      %61 = vsyncadd [#allocation9], %s60
      %s62 = sshll.u32 [#allocation8], 4
      %s63 = int_to_ptr.vmem [resolvable:$true] %s62
      %68 = dma.hbm_to_vmem [thread:$0]  %s5, 1024, %s63, [#allocation9], 128, 128, 8
    $region25: #{tpu_custom_call.1} parent=1 // pred_fallthru
      _
    // Predicated region
    $region26: #{tpu_custom_call.1} parent=1 // pred_check
      _
    $region27: #{tpu_custom_call.1} parent=1 // pred_check_branch
      %70 = sbr.rel (0) target = $region29
    $region28: #{tpu_custom_call.1} parent=1 // pred_region
      _
    $region29: #{tpu_custom_call.1} parent=1 // pred_fallthru
      _
    // Predicated region
    $region30: #{tpu_custom_call.1} parent=1 // pred_check
      _
    $region31: #{tpu_custom_call.1} parent=1 // pred_check_branch
      %72 = sbr.rel (0) target = $region33
    $region32: #{tpu_custom_call.1} parent=1 // pred_region
      _
    $region33: #{tpu_custom_call.1} parent=1 // pred_fallthru
      _
    // Predicated region
    $region34: #{tpu_custom_call.1} parent=1 // pred_check
      _
    $region35: #{tpu_custom_call.1} parent=1 // pred_check_branch
      %74 = sbr.rel (0) target = $region37
    $region36: #{tpu_custom_call.1} parent=1 // pred_region
      _
    $region37: #{tpu_custom_call.1} parent=1 // pred_fallthru
      _
    // Predicated region
    $region38: #{tpu_custom_call.1} parent=1 // pred_check
      _
    $region39: #{tpu_custom_call.1} parent=1 // pred_check_branch
      %76 = sbr.rel (0) target = $region41
    $region40: #{tpu_custom_call.1} parent=1 // pred_region
      %77 = dma.done [#allocation4], 128
    $region41: #{tpu_custom_call.1} parent=1 // pred_fallthru
      _
    // Predicated region
    $region42: #{tpu_custom_call.1} parent=1 // pred_check
      _
    $region43: #{tpu_custom_call.1} parent=1 // pred_check_branch
      %79 = sbr.rel (0) target = $region45
    $region44: #{tpu_custom_call.1} parent=1 // pred_region
      %80 = dma.done [#allocation6], 640
    $region45: #{tpu_custom_call.1} parent=1 // pred_fallthru
      _
    // Predicated region
    $region46: #{tpu_custom_call.1} parent=1 // pred_check
      _
    $region47: #{tpu_custom_call.1} parent=1 // pred_check_branch
      %82 = sbr.rel (0) target = $region49
    $region48: #{tpu_custom_call.1} parent=1 // pred_region
      %83 = dma.done [#allocation6], 768
    $region49: #{tpu_custom_call.1} parent=1 // pred_fallthru
      _
    // Predicated region
    $region50: #{tpu_custom_call.1} parent=1 // pred_check
      _
    $region51: #{tpu_custom_call.1} parent=1 // pred_check_branch
      %85 = sbr.rel (0) target = $region53
    $region52: #{tpu_custom_call.1} parent=1 // pred_region
      %86 = dma.done [#allocation9], 1024
    $region53: #{tpu_custom_call.1} parent=1 // pred_fallthru
      _
    %v87 = vld [vmem:[#allocation3] sm:$0xff]
    %v88 = vld [vmem:[#allocation5] sm:$0xff]
    %v89 = vld [vmem:[#allocation5 + $0x8] sm:$0xff]
    %v90 = vld [vmem:[#allocation5 + $0x10] sm:$0xff]
    %v91 = vld [vmem:[#allocation5 + $0x18] sm:$0xff]
    %v92 = vld [vmem:[#allocation5 + $0x20] sm:$0xff]
    %v93 = vld [vmem:[%s2] sm:$0x1]
    %v95 = vlaneseq
    %v96 = vshrl.u32 %v95, 7
    %v97 = vsub.s32 0, %v96
    %v98 = vrot.slane %v93, %v97
    %vm100 = vcmask 326656
    %v102 = vsel %vm100, %v87, 0
    %104 = vmatprep.subr.mxu0 0.0
    %105 = vmatpush1.msra.mxu0 %v88
    %106 = vmatprep.subr.mxu0 0.0
    %107 = vmatpush1.msra.mxu0 %v89
    %108 = vmatprep.subr.mxu0 0.0
    %109 = vmatpush1.msra.mxu0 %v90
    %110 = vmatprep.subr.mxu0 0.0
    %111 = vmatpush1.msra.mxu0 %v91
    %112 = vmatprep.subr.mxu0 0.0
    %113 = vmatpush1.msra.mxu0 %v92
    %114 = vmatprep.subr.mxu0 0.0
    %115 = vmatpush1.msra.mxu0 0.0
    %116 = vmatprep.subr.mxu0 0.0
    %117 = vmatpush1.msra.mxu0 0.0
    %118 = vmatprep.subr.mxu0 0.0
    %119 = vmatpush1.msra.mxu0 0.0
    %120 = vmatprep.subr.mxu0 0.0
    %121 = vmatpush1.msra.mxu0 0.0
    %122 = vmatprep.subr.mxu0 0.0
    %123 = vmatpush1.msra.mxu0 0.0
    %124 = vmatprep.subr.mxu0 0.0
    %125 = vmatpush1.msra.mxu0 0.0
    %126 = vmatprep.subr.mxu0 0.0
    %127 = vmatpush1.msra.mxu0 0.0
    %128 = vmatprep.subr.mxu0 0.0
    %129 = vmatpush1.msra.mxu0 0.0
    %130 = vmatprep.subr.mxu0 0.0
    %131 = vmatpush1.msra.mxu0 0.0
    %132 = vmatprep.subr.mxu0 0.0
    %133 = vmatpush1.msra.mxu0 0.0
    %134 = vmatprep.subr.mxu0 0.0
    %135 = vmatpush1.msra.mxu0 0.0
    %136 = vmatprep.subr.mxu0 0.0
    %137 = vmatpush1.msra.mxu0 0.0
    %138 = vmatprep.subr.mxu0 0.0
    %139 = vmatpush1.msra.mxu0 0.0
    %140 = vmatprep.subr.mxu0 0.0
    %141 = vmatpush1.msra.mxu0 0.0
    %142 = vmatprep.subr.mxu0 0.0
    %143 = vmatpush1.msra.mxu0 0.0
    %144 = vmatprep.subr.mxu0 0.0
    %145 = vmatpush1.msra.mxu0 0.0
    %146 = vmatprep.subr.mxu0 0.0
    %147 = vmatpush1.msra.mxu0 0.0
    %148 = vmatprep.subr.mxu0 0.0
    %149 = vmatpush1.msra.mxu0 0.0
    %150 = vmatprep.subr.mxu0 0.0
    %151 = vmatpush1.msra.mxu0 0.0
    %152 = vmatprep.subr.mxu0 0.0
    %153 = vmatpush1.msra.mxu0 0.0
    %154 = vmatprep.subr.mxu0 0.0
    %155 = vmatpush1.msra.mxu0 0.0
    %156 = vmatprep.subr.mxu0 0.0
    %157 = vmatpush1.msra.mxu0 0.0
    %158 = vmatprep.subr.mxu0 0.0
    %159 = vmatpush1.msra.mxu0 0.0
    %160 = vmatprep.subr.mxu0 0.0
    %161 = vmatpush1.msra.mxu0 0.0
    %162 = vmatprep.subr.mxu0 0.0
    %163 = vmatpush1.msra.mxu0 0.0
    %164 = vmatprep.subr.mxu0 0.0
    %165 = vmatpush1.msra.mxu0 0.0
    %166 = vmatprep.subr.mxu0 0.0
    %167 = vmatpush1.msra.mxu0 0.0
    %168 = vmatprep.mubr.f32.mxu0 0.0
    %169 = vmatmul.mubr.f32.gmra.mrb[0].mxu0 %v102
    %v170 = vpop.f32.mrb[0].mxu0
    %v171 = vadd.f32 %v98, %v170
    %v172 = vpop.f32.mrb[0].mxu0
    %173 = vdwg.mxu0
    %v174 = vmax.f32 %v171, 0.0
    %v175 = vld [vmem:[#allocation7] sm:$0xff]
    %v176 = vld [vmem:[#allocation7 + $0x8] sm:$0xff]
    %v177 = vld [vmem:[#allocation7 + $0x10] sm:$0xff]
    %v178 = vld [vmem:[#allocation7 + $0x18] sm:$0xff]
    %v179 = vld [vmem:[#allocation7 + $0x20] sm:$0xff]
    %v180 = vld [vmem:[#allocation7 + $0x28] sm:$0xff]
    %v181 = vld [vmem:[%s4] sm:$0x1]
    %v183 = vlaneseq
    %v184 = vshrl.u32 %v183, 7
    %v185 = vsub.s32 0, %v184
    %v186 = vrot.slane %v181, %v185
    %vm188 = vcmask 392192
    %v190 = vsel %vm188, %v174, 0
    %192 = vmatprep.subr.mxu0 0.0
    %193 = vmatpush1.msra.mxu0 %v175
    %194 = vmatprep.subr.mxu0 0.0
    %195 = vmatpush1.msra.mxu0 %v176
    %196 = vmatprep.subr.mxu0 0.0
    %197 = vmatpush1.msra.mxu0 %v177
    %198 = vmatprep.subr.mxu0 0.0
    %199 = vmatpush1.msra.mxu0 %v178
    %200 = vmatprep.subr.mxu0 0.0
    %201 = vmatpush1.msra.mxu0 %v179
    %202 = vmatprep.subr.mxu0 0.0
    %203 = vmatpush1.msra.mxu0 %v180
    %204 = vmatprep.subr.mxu0 0.0
    %205 = vmatpush1.msra.mxu0 0.0
    %206 = vmatprep.subr.mxu0 0.0
    %207 = vmatpush1.msra.mxu0 0.0
    %208 = vmatprep.subr.mxu0 0.0
    %209 = vmatpush1.msra.mxu0 0.0
    %210 = vmatprep.subr.mxu0 0.0
    %211 = vmatpush1.msra.mxu0 0.0
    %212 = vmatprep.subr.mxu0 0.0
    %213 = vmatpush1.msra.mxu0 0.0
    %214 = vmatprep.subr.mxu0 0.0
    %215 = vmatpush1.msra.mxu0 0.0
    %216 = vmatprep.subr.mxu0 0.0
    %217 = vmatpush1.msra.mxu0 0.0
    %218 = vmatprep.subr.mxu0 0.0
    %219 = vmatpush1.msra.mxu0 0.0
    %220 = vmatprep.subr.mxu0 0.0
    %221 = vmatpush1.msra.mxu0 0.0
    %222 = vmatprep.subr.mxu0 0.0
    %223 = vmatpush1.msra.mxu0 0.0
    %224 = vmatprep.subr.mxu0 0.0
    %225 = vmatpush1.msra.mxu0 0.0
    %226 = vmatprep.subr.mxu0 0.0
    %227 = vmatpush1.msra.mxu0 0.0
    %228 = vmatprep.subr.mxu0 0.0
    %229 = vmatpush1.msra.mxu0 0.0
    %230 = vmatprep.subr.mxu0 0.0
    %231 = vmatpush1.msra.mxu0 0.0
    %232 = vmatprep.subr.mxu0 0.0
    %233 = vmatpush1.msra.mxu0 0.0
    %234 = vmatprep.subr.mxu0 0.0
    %235 = vmatpush1.msra.mxu0 0.0
    %236 = vmatprep.subr.mxu0 0.0
    %237 = vmatpush1.msra.mxu0 0.0
    %238 = vmatprep.subr.mxu0 0.0
    %239 = vmatpush1.msra.mxu0 0.0
    %240 = vmatprep.subr.mxu0 0.0
    %241 = vmatpush1.msra.mxu0 0.0
    %242 = vmatprep.subr.mxu0 0.0
    %243 = vmatpush1.msra.mxu0 0.0
    %244 = vmatprep.subr.mxu0 0.0
    %245 = vmatpush1.msra.mxu0 0.0
    %246 = vmatprep.subr.mxu0 0.0
    %247 = vmatpush1.msra.mxu0 0.0
    %248 = vmatprep.subr.mxu0 0.0
    %249 = vmatpush1.msra.mxu0 0.0
    %250 = vmatprep.subr.mxu0 0.0
    %251 = vmatpush1.msra.mxu0 0.0
    %252 = vmatprep.subr.mxu0 0.0
    %253 = vmatpush1.msra.mxu0 0.0
    %254 = vmatprep.subr.mxu0 0.0
    %255 = vmatpush1.msra.mxu0 0.0
    %256 = vmatprep.mubr.f32.mxu0 0.0
    %257 = vmatmul.mubr.f32.gmra.mrb[0].mxu0 %v190
    %v258 = vpop.f32.mrb[0].mxu0
    %v259 = vadd.f32 %v186, %v258
    %v260 = vpop.f32.mrb[0].mxu0
    %261 = vdwg.mxu0
    %v262 = vmax.f32 %v259, 0.0
    %v263 = vld [vmem:[#allocation8] sm:$0xff]
    %v264 = vld [vmem:[#allocation8 + $0x8] sm:$0xff]
    %v265 = vld [vmem:[#allocation8 + $0x10] sm:$0xff]
    %v266 = vld [vmem:[#allocation8 + $0x18] sm:$0xff]
    %v267 = vld [vmem:[#allocation8 + $0x20] sm:$0xff]
    %v268 = vld [vmem:[#allocation8 + $0x28] sm:$0xff]
    %v269 = vld [vmem:[#allocation8 + $0x30] sm:$0xff]
    %v270 = vld [vmem:[#allocation8 + $0x38] sm:$0xff]
    %v271 = vld [vmem:[%s6] sm:$0x1]
    %v273 = vlaneseq
    %v274 = vshrl.u32 %v273, 7
    %v275 = vsub.s32 0, %v274
    %v276 = vrot.slane %v271, %v275
    %vm278 = vcmask 523264
    %v280 = vsel %vm278, %v262, 0
    %282 = vmatprep.subr.mxu0 0.0
    %283 = vmatpush1.msra.mxu0 %v263
    %284 = vmatprep.subr.mxu0 0.0
    %285 = vmatpush1.msra.mxu0 %v264
    %286 = vmatprep.subr.mxu0 0.0
    %287 = vmatpush1.msra.mxu0 %v265
    %288 = vmatprep.subr.mxu0 0.0
    %289 = vmatpush1.msra.mxu0 %v266
    %290 = vmatprep.subr.mxu0 0.0
    %291 = vmatpush1.msra.mxu0 %v267
    %292 = vmatprep.subr.mxu0 0.0
    %293 = vmatpush1.msra.mxu0 %v268
    %294 = vmatprep.subr.mxu0 0.0
    %295 = vmatpush1.msra.mxu0 %v269
    %296 = vmatprep.subr.mxu0 0.0
    %297 = vmatpush1.msra.mxu0 %v270
    %298 = vmatprep.subr.mxu0 0.0
    %299 = vmatpush1.msra.mxu0 0.0
    %300 = vmatprep.subr.mxu0 0.0
    %301 = vmatpush1.msra.mxu0 0.0
    %302 = vmatprep.subr.mxu0 0.0
    %303 = vmatpush1.msra.mxu0 0.0
    %304 = vmatprep.subr.mxu0 0.0
    %305 = vmatpush1.msra.mxu0 0.0
    %306 = vmatprep.subr.mxu0 0.0
    %307 = vmatpush1.msra.mxu0 0.0
    %308 = vmatprep.subr.mxu0 0.0
    %309 = vmatpush1.msra.mxu0 0.0
    %310 = vmatprep.subr.mxu0 0.0
    %311 = vmatpush1.msra.mxu0 0.0
    %312 = vmatprep.subr.mxu0 0.0
    %313 = vmatpush1.msra.mxu0 0.0
    %314 = vmatprep.subr.mxu0 0.0
    %315 = vmatpush1.msra.mxu0 0.0
    %316 = vmatprep.subr.mxu0 0.0
    %317 = vmatpush1.msra.mxu0 0.0
    %318 = vmatprep.subr.mxu0 0.0
    %319 = vmatpush1.msra.mxu0 0.0
    %320 = vmatprep.subr.mxu0 0.0
    %321 = vmatpush1.msra.mxu0 0.0
    %322 = vmatprep.subr.mxu0 0.0
    %323 = vmatpush1.msra.mxu0 0.0
    %324 = vmatprep.subr.mxu0 0.0
    %325 = vmatpush1.msra.mxu0 0.0
    %326 = vmatprep.subr.mxu0 0.0
    %327 = vmatpush1.msra.mxu0 0.0
    %328 = vmatprep.subr.mxu0 0.0
    %329 = vmatpush1.msra.mxu0 0.0
    %330 = vmatprep.subr.mxu0 0.0
    %331 = vmatpush1.msra.mxu0 0.0
    %332 = vmatprep.subr.mxu0 0.0
    %333 = vmatpush1.msra.mxu0 0.0
    %334 = vmatprep.subr.mxu0 0.0
    %335 = vmatpush1.msra.mxu0 0.0
    %336 = vmatprep.subr.mxu0 0.0
    %337 = vmatpush1.msra.mxu0 0.0
    %338 = vmatprep.subr.mxu0 0.0
    %339 = vmatpush1.msra.mxu0 0.0
    %340 = vmatprep.subr.mxu0 0.0
    %341 = vmatpush1.msra.mxu0 0.0
    %342 = vmatprep.subr.mxu0 0.0
    %343 = vmatpush1.msra.mxu0 0.0
    %344 = vmatprep.subr.mxu0 0.0
    %345 = vmatpush1.msra.mxu0 0.0
    %346 = vmatprep.mubr.f32.mxu0 0.0
    %347 = vmatmul.mubr.f32.gmra.mrb[0].mxu0 %v280
    %v348 = vpop.f32.mrb[0].mxu0
    %v349 = vadd.f32 %v276, %v348
    %v350 = vpop.f32.mrb[0].mxu0
    %351 = vdwg.mxu0
    %v352 = vmax.f32 %v349, 0.0
    %v353 = vld [vmem:[%s7] sm:$0x1]
    %v355 = vlaneseq
    %v356 = vshrl.u32 %v355, 7
    %v357 = vsub.s32 0, %v356
    %v358 = vrot.slane %v353, %v357
    %v360 = vmul.f32 %v352, %v358
    %v361 = vsel %vm278, %v360, 0.0
    %362 = vadd.xlane.f32.xlu0 %v361
    %v363 = vpop.xlane.xlu0 %362
    %v364 = vld [vmem:[#allocation2] sm:$0x1]
    %v366 = vlaneseq
    %v367 = vshrl.u32 %v366, 7
    %v368 = vsub.s32 0, %v367
    %v369 = vrot.slane %v364, %v368
    %v371 = vadd.f32 %v363, %v369
    %vm372 = vcmask 7168
    %373 = vst.msk [vmem:[%s9] sm:$0xff] %vm372, %v371
    // Predicated region
    $region54: #{tpu_custom_call.1} parent=1 // pred_check
      _
    $region55: #{tpu_custom_call.1} parent=1 // pred_check_branch
      %375 = sbr.rel (0) target = $region57
    $region56: #{tpu_custom_call.1} parent=1 // pred_region
      _
    $region57: #{tpu_custom_call.1} parent=1 // pred_fallthru
      _
    // Predicated region
    $region58: #{tpu_custom_call.1} parent=1 // pred_check
      _
    $region59: #{tpu_custom_call.1} parent=1 // pred_check_branch
      %377 = sbr.rel (0) target = $region61
    $region60: #{tpu_custom_call.1} parent=1 // pred_region
      _
    $region61: #{tpu_custom_call.1} parent=1 // pred_fallthru
      _
    %378 = vsyncpa [#allocation4], 1
    %379 = vsyncpa [#allocation6], 1
    %380 = vsyncpa [#allocation9], 1

</llo_original>
